<compile_context>
chip_gen: v6e
topology: v6e:2x2x1
jax: 0.10.0
libtpu: 0.0.40
codegen_flags: <defaults>
</compile_context>

<pallas_src>
import functools

import jax
import jax.numpy as jnp
from jax.experimental import pallas as pl
from jax.experimental.pallas import tpu as pltpu


def _round_up(x: int, m: int) -> int:
    return (x + m - 1) // m * m


def _adaptive_embed_kernel(starts_ref, ends_ref, nchunks_ref,   # scalar prefetch (SMEM)
                           x_ref, e_ref, w_ref,                 # inputs (VMEM)
                           out_ref,                             # output, resident per N tile
                           z_ref):                              # scratch (TN, dm_pad) f32
    b = pl.program_id(1)               # bucket index
    l = pl.program_id(2)               # table-length chunk index
    num_l = pl.num_programs(2)

    # Zero the resident output tile once per token tile.
    @pl.when((b == 0) & (l == 0))
    def _():
        out_ref[...] = jnp.zeros_like(out_ref)

    start = starts_ref[b]
    end = ends_ref[b]

    x = x_ref[...]                                   # (TN, 1) int32 token ids
    in_bucket = (x >= start) & (x <= end)            # (TN, 1) bool
    rel = x - start                                  # bucket-relative id

    tl = e_ref.shape[0]                              # length-chunk size
    lo = l * tl
    # Tokens of this tile that fall in THIS chunk of THIS bucket's table.
    in_chunk = in_bucket & (rel >= lo) & (rel < lo + tl)

    bucket_nonempty = jnp.any(in_bucket)             # same for every l of this (n, b)
    chunk_nonempty = jnp.any(in_chunk)

    # Zero the gather accumulator once per (token tile, bucket).
    @pl.when(bucket_nonempty & (l == 0))
    def _():
        z_ref[...] = jnp.zeros_like(z_ref)

    # Gather-as-matmul over this chunk, only if some token actually hits it.
    # (Per-chunk gating caps gather flops at ~O(TN^2 * dm) per bucket instead
    #  of O(TN * len_b * dm) for huge tail buckets.)
    @pl.when(chunk_nonempty)
    def _():
        col = jax.lax.broadcasted_iota(jnp.int32, (x.shape[0], tl), 1) + lo
        # Membership folded into the one-hot: out-of-bucket tokens select no
        # row at all.  0/1 values are exact in bf16 -> gather stays exact.
        onehot = ((col == rel) & in_bucket).astype(jnp.bfloat16)     # (TN, TL)
        z_ref[...] += jnp.dot(onehot, e_ref[...],
                              preferred_element_type=jnp.float32)    # (TN, dm_pad)

    # Project to the full embedding dim once per bucket and accumulate.
    # z rows are exact bf16 values (one-hot gather of a bf16 table), so the
    # cast back to bf16 for the MXU projection is lossless.
    @pl.when(bucket_nonempty & (l == num_l - 1))
    def _():
        out_ref[...] += jnp.dot(z_ref[...].astype(jnp.bfloat16), w_ref[...],
                                preferred_element_type=jnp.float32)


def prepare_adaptive_tables(E_list, W_list, *, tl: int = 512):
    """One-time host-side weight prep (hoisted out of the forward path):
    pad every bucket's table to (len_pad, dm_pad) and projection to
    (dm_pad, D_pad), cast to bfloat16.  Returns (e_p, w_p, lens, TL, D)."""
    nb = len(E_list)
    D = W_list[0].shape[1]
    max_len = max(E.shape[0] for E in E_list)
    max_dim = max(E.shape[1] for E in E_list)

    D_pad = _round_up(D, 128)            # lane-dense output stores
    dm_pad = _round_up(max_dim, 128)     # MXU-aligned contraction dim
    TL = min(_round_up(tl, 8), _round_up(max_len, 8))
    len_pad = _round_up(max_len, TL)

    e_p = jnp.stack([
        jnp.pad(E.astype(jnp.bfloat16),
                ((0, len_pad - E.shape[0]), (0, dm_pad - E.shape[1])))
        for E in E_list])                                   # (nb, len_pad, dm_pad) bf16
    w_p = jnp.stack([
        jnp.pad(W.astype(jnp.bfloat16),
                ((0, dm_pad - W.shape[0]), (0, D_pad - W.shape[1])))
        for W in W_list])                                   # (nb, dm_pad, D_pad) bf16
    lens = jnp.array([E.shape[0] for E in E_list], jnp.int32)
    return e_p, w_p, lens, TL, D


@functools.partial(jax.jit,
                   static_argnames=("tl", "d_out", "tn_max", "vmem_limit_bytes"))
def adaptive_input_embedding(x, e_p, w_p, starts, ends, lens, *,
                             tl: int, d_out: int, tn_max: int = 256,
                             vmem_limit_bytes=None):
    """x: (B, L) int32 token ids.
    e_p / w_p / lens: pre-padded bf16 stacks from prepare_adaptive_tables.
    Returns (B, L, d_out) float32 embeddings.

    Defaults (TN<=256, TL=512, bf16 tables) keep per-step VMEM well under the
    32 MiB scoped default on every generation (incl. v7x's 64 MiB physical).
    On v5e/v6e (128 MiB VMEM) you can raise tn_max/tl and vmem_limit_bytes."""
    B, L = x.shape
    N = B * L
    nb, len_pad, dm_pad = e_p.shape
    D_pad = w_p.shape[-1]
    TL = tl
    assert len_pad % TL == 0, "tables must be prepared with the same TL"

    # --- token tiling ---------------------------------------------------
    # Prefer >= 2 token tiles so both v7x TensorCores get work on small N.
    TN = _round_up(min(tn_max, max(8, -(-N // 2))), 8)
    TN = min(TN, _round_up(N, 8))
    N_pad = _round_up(N, TN)

    # Padded ids use a large negative sentinel: below every bucket start (even
    # negative ones), so padding never aliases into a bucket.
    x_flat = jnp.pad(x.reshape(-1).astype(jnp.int32), (0, N_pad - N),
                     constant_values=-(1 << 30)).reshape(N_pad, 1)

    # Per-bucket number of valid length chunks (used to clamp the E index_map,
    # so short buckets never DMA their zero padding).
    num_chunks = (lens.astype(jnp.int32) + TL - 1) // TL

    grid = (N_pad // TN, nb, len_pad // TL)

    cost = pl.CostEstimate(
        flops=2 * N_pad * nb * (len_pad * dm_pad + dm_pad * D_pad),
        transcendentals=0,
        bytes_accessed=(e_p.size + w_p.size) * 2 * (N_pad // TN)
                       + N_pad * D_pad * 4 + N_pad * 4,
    )

    cp = dict(dimension_semantics=("parallel", "arbitrary", "arbitrary"))
    if vmem_limit_bytes is not None:
        cp["vmem_limit_bytes"] = vmem_limit_bytes

    out = pl.pallas_call(
        _adaptive_embed_kernel,
        out_shape=jax.ShapeDtypeStruct((N_pad, D_pad), jnp.float32),
        grid_spec=pltpu.PrefetchScalarGridSpec(
            num_scalar_prefetch=3,                    # starts, ends, num_chunks -> SMEM
            grid=grid,
            in_specs=[
                # token ids: resident per token tile
                pl.BlockSpec((TN, 1), lambda n, b, l, s, e, nc: (n, 0)),
                # E_i length-chunk (kernel sees (TL, dm_pad)); l clamped to the
                # bucket's last valid chunk -> no re-DMA of zero padding.
                pl.BlockSpec((pl.Squeezed(), TL, dm_pad),
                             lambda n, b, l, s, e, nc:
                                 (b, jnp.minimum(l, nc[b] - 1), 0)),
                # W_i: kernel sees (dm_pad, D_pad), resident per bucket
                pl.BlockSpec((pl.Squeezed(), dm_pad, D_pad),
                             lambda n, b, l, s, e, nc: (b, 0, 0)),
            ],
            out_specs=pl.BlockSpec((TN, D_pad), lambda n, b, l, s, e, nc: (n, 0)),
            scratch_shapes=[pltpu.VMEM((TN, dm_pad), jnp.float32)],
        ),
        compiler_params=pltpu.CompilerParams(**cp),
        cost_estimate=cost,
    )(starts, ends, num_chunks, x_flat, e_p, w_p)

    return out[:N, :d_out].reshape(B, L, d_out)


def _reference(x, E_list, W_list, starts, ends):
    """Pure-JAX reference mirroring the PyTorch forward."""
    D = W_list[0].shape[1]
    xf = x.reshape(-1)
    out = jnp.zeros((xf.shape[0], D), jnp.float32)
    for i in range(len(E_list)):
        mask = (xf >= starts[i]) & (xf <= ends[i])
        rel = jnp.clip(xf - starts[i], 0, E_list[i].shape[0] - 1)
        z = E_list[i][rel].astype(jnp.float32) @ W_list[i].astype(jnp.float32)
        out = out + jnp.where(mask[:, None], z, 0.0)
    return out.reshape(x.shape + (D,))


if __name__ == "__main__":
    # ----- synthetic config (small, consistent with the module) -----
    embedding_dim = 32                       # D
    decay = 2
    vocab = 32
    bucket_bounds = (0, 16, 24, 32)          # 3 contiguous buckets: 16 / 8 / 8 ids
    nb = len(bucket_bounds) - 1
    B, L = 2, 9                              # N=18: exercises token padding/sentinel

    bucket_lens = [bucket_bounds[i + 1] - bucket_bounds[i] for i in range(nb)]
    bucket_dims = [embedding_dim // decay ** i for i in range(nb)]   # 32, 16, 8
    starts = jnp.array(bucket_bounds[:-1], jnp.int32)
    ends = jnp.array([bucket_bounds[i + 1] - 1 for i in range(nb)], jnp.int32)

    # Embedding ~ N(0,1), W ~ U(-0.01, 0.01) — mirrors the PyTorch init.
    key = jax.random.PRNGKey(0)
    keys = jax.random.split(key, 2 * nb + 1)
    E_list = [jax.random.normal(keys[i], (bucket_lens[i], bucket_dims[i]), jnp.float32)
              for i in range(nb)]
    W_list = [jax.random.uniform(keys[nb + i], (bucket_dims[i], embedding_dim),
                                 jnp.float32, -0.01, 0.01)
              for i in range(nb)]

    # One-time weight preparation (padding + bf16 cast hoisted out of forward).
    # Small TL so the demo exercises multiple length chunks and index_map clamping.
    e_p, w_p, lens, TL, D = prepare_adaptive_tables(E_list, W_list, tl=8)

    x = jax.random.randint(keys[2 * nb], (B, L), 0, vocab, jnp.int32)

    # Small tn_max so the demo exercises multiple token tiles.
    out = adaptive_input_embedding(x, e_p, w_p, starts, ends, lens,
                                   tl=TL, d_out=D, tn_max=8)
    out = jax.block_until_ready(out)

    # Reference with the same bf16 weight rounding (gather is exact -> tight tol).
    E_bf = [E.astype(jnp.bfloat16).astype(jnp.float32) for E in E_list]
    W_bf = [W.astype(jnp.bfloat16).astype(jnp.float32) for W in W_list]
    ref_bf16 = _reference(x, E_bf, W_bf, starts, ends)
    # Full-f32 reference (PyTorch semantics) -> relaxed tol for bf16 weights.
    ref_f32 = _reference(x, E_list, W_list, starts, ends)

    assert out.shape == (B, L, embedding_dim)
    assert jnp.allclose(out, ref_bf16, atol=1e-4, rtol=1e-4), "mismatch vs bf16 reference"
    assert jnp.allclose(out, ref_f32, atol=1e-2, rtol=1e-2), "mismatch vs f32 reference"

    print("KERNEL_OK")
</pallas_src>

<mosaic_0001>
module attributes {stable_mosaic.version = 11 : i64} {
  func.func @_adaptive_embed_kernel(%arg0: i32, %arg1: i32, %arg2: i32, %arg3: memref<3xi32, #tpu.memory_space<smem>>, %arg4: memref<3xi32, #tpu.memory_space<smem>>, %arg5: memref<3xi32, #tpu.memory_space<smem>>, %arg6: memref<8x1xi32, #tpu.memory_space<vmem>>, %arg7: memref<1x8x128xbf16, #tpu.memory_space<vmem>>, %arg8: memref<1x128x128xbf16, #tpu.memory_space<vmem>>, %arg9: memref<8x128xf32, #tpu.memory_space<vmem>>, %arg10: memref<8x128xf32, #tpu.memory_space<vmem>>) attributes {dimension_semantics = [#tpu.dimension_semantics<parallel>, #tpu.dimension_semantics<arbitrary>, #tpu.dimension_semantics<arbitrary>], iteration_bounds = array<i64: 3, 3, 2>, scalar_prefetch = 3 : i64, scratch_operands = 1 : i64, tpu.core_type = #tpu.core_type<tc>, window_params = [{transform_indices = @transform_0, window_bounds = array<i64: 8, 1>}, {transform_indices = @transform_1, window_bounds = array<i64: 1, 8, 128>}, {transform_indices = @transform_2, window_bounds = array<i64: 1, 128, 128>}, {transform_indices = @transform_3, window_bounds = array<i64: 8, 128>}]} {
    %c0_i32 = arith.constant 0 : i32
    %0 = arith.cmpi eq, %arg1, %c0_i32 : i32
    %c0_i32_0 = arith.constant 0 : i32
    %1 = arith.cmpi eq, %arg2, %c0_i32_0 : i32
    %2 = arith.andi %0, %1 : i1
    %3 = arith.extui %2 : i1 to i32
    %c0_i32_1 = arith.constant 0 : i32
    %4 = arith.cmpi ne, %3, %c0_i32_1 : i32
    scf.if %4 {
      %cst_15 = arith.constant 0.000000e+00 : f32
      %51 = vector.broadcast %cst_15 : f32 to vector<8x128xf32>
      %c0_16 = arith.constant 0 : index
      %c0_17 = arith.constant 0 : index
      %52 = vector.load %arg9[%c0_16, %c0_17] : memref<8x128xf32, #tpu.memory_space<vmem>>, vector<8x128xf32>
      tpu.vector_store %arg9[%c0_16, %c0_17], %51 {strides = array<i32>} : memref<8x128xf32, #tpu.memory_space<vmem>>, vector<8x128xf32>,
    } else {
    }
    %5 = arith.index_cast %arg1 : i32 to index
    %6 = memref.load %arg3[%5] : memref<3xi32, #tpu.memory_space<smem>>
    %7 = arith.index_cast %arg1 : i32 to index
    %8 = memref.load %arg4[%7] : memref<3xi32, #tpu.memory_space<smem>>
    %c0 = arith.constant 0 : index
    %c0_2 = arith.constant 0 : index
    %9 = vector.load %arg6[%c0, %c0_2] : memref<8x1xi32, #tpu.memory_space<vmem>>, vector<8x1xi32>
    %10 = vector.broadcast %6 : i32 to vector<8x1xi32>
    %11 = arith.cmpi sge, %9, %10 : vector<8x1xi32>
    %12 = vector.broadcast %8 : i32 to vector<8x1xi32>
    %13 = arith.cmpi sle, %9, %12 : vector<8x1xi32>
    %14 = arith.andi %11, %13 : vector<8x1xi1>
    %15 = vector.broadcast %6 : i32 to vector<8x1xi32>
    %16 = arith.subi %9, %15 : vector<8x1xi32>
    %c8_i32 = arith.constant 8 : i32
    %17 = arith.muli %arg2, %c8_i32 : i32
    %18 = vector.broadcast %17 : i32 to vector<8x1xi32>
    %19 = arith.cmpi sge, %16, %18 : vector<8x1xi32>
    %20 = arith.andi %14, %19 : vector<8x1xi1>
    %c8_i32_3 = arith.constant 8 : i32
    %21 = arith.addi %17, %c8_i32_3 : i32
    %22 = vector.broadcast %21 : i32 to vector<8x1xi32>
    %23 = arith.cmpi slt, %16, %22 : vector<8x1xi32>
    %24 = arith.andi %20, %23 : vector<8x1xi1>
    %cst = arith.constant 1.000000e+00 : f32
    %cst_4 = arith.constant 0.000000e+00 : f32
    %25 = vector.broadcast %cst : f32 to vector<8x1xf32>
    %26 = vector.broadcast %cst_4 : f32 to vector<8x1xf32>
    %27 = arith.select %14, %25, %26 : vector<8x1xi1>, vector<8x1xf32>
    %28 = vector.shape_cast %27 : vector<8x1xf32> to vector<1x8x1xf32>
    %cst_5 = arith.constant dense<0xFF800000> : vector<1xf32>
    %29 = vector.multi_reduction <maximumf>, %28, %cst_5 [1, 2] : vector<1x8x1xf32> to vector<1xf32>
    %30 = vector.shape_cast %29 : vector<1xf32> to vector<1x1x1xf32>
    %31 = vector.extract %30[0, 0, 0] : f32 from vector<1x1x1xf32>
    %cst_6 = arith.constant 0.000000e+00 : f32
    %32 = arith.cmpf ogt, %31, %cst_6 : f32
    %cst_7 = arith.constant 1.000000e+00 : f32
    %cst_8 = arith.constant 0.000000e+00 : f32
    %33 = vector.broadcast %cst_7 : f32 to vector<8x1xf32>
    %34 = vector.broadcast %cst_8 : f32 to vector<8x1xf32>
    %35 = arith.select %24, %33, %34 : vector<8x1xi1>, vector<8x1xf32>
    %36 = vector.shape_cast %35 : vector<8x1xf32> to vector<1x8x1xf32>
    %cst_9 = arith.constant dense<0xFF800000> : vector<1xf32>
    %37 = vector.multi_reduction <maximumf>, %36, %cst_9 [1, 2] : vector<1x8x1xf32> to vector<1xf32>
    %38 = vector.shape_cast %37 : vector<1xf32> to vector<1x1x1xf32>
    %39 = vector.extract %38[0, 0, 0] : f32 from vector<1x1x1xf32>
    %cst_10 = arith.constant 0.000000e+00 : f32
    %40 = arith.cmpf ogt, %39, %cst_10 : f32
    %c0_i32_11 = arith.constant 0 : i32
    %41 = arith.cmpi eq, %arg2, %c0_i32_11 : i32
    %42 = arith.andi %32, %41 : i1
    %43 = arith.extui %42 : i1 to i32
    %c0_i32_12 = arith.constant 0 : i32
    %44 = arith.cmpi ne, %43, %c0_i32_12 : i32
    scf.if %44 {
      %cst_15 = arith.constant 0.000000e+00 : f32
      %51 = vector.broadcast %cst_15 : f32 to vector<8x128xf32>
      %c0_16 = arith.constant 0 : index
      %c0_17 = arith.constant 0 : index
      %52 = vector.load %arg10[%c0_16, %c0_17] : memref<8x128xf32, #tpu.memory_space<vmem>>, vector<8x128xf32>
      tpu.vector_store %arg10[%c0_16, %c0_17], %51 {strides = array<i32>} : memref<8x128xf32, #tpu.memory_space<vmem>>, vector<8x128xf32>,
    } else {
    }
    %45 = arith.extui %40 : i1 to i32
    %c0_i32_13 = arith.constant 0 : i32
    %46 = arith.cmpi ne, %45, %c0_i32_13 : i32
    scf.if %46 {
      %51 = tpu.iota {dimensions = array<i32: 1>} : vector<8x8xi32>
      %52 = vector.broadcast %17 : i32 to vector<8x8xi32>
      %53 = arith.addi %51, %52 : vector<8x8xi32>
      %54 = vector.broadcast %16 : vector<8x1xi32> to vector<8x8xi32>
      %55 = arith.cmpi eq, %53, %54 : vector<8x8xi32>
      %56 = vector.broadcast %14 : vector<8x1xi1> to vector<8x8xi1>
      %57 = arith.andi %55, %56 : vector<8x8xi1>
      %58 = arith.extui %57 : vector<8x8xi1> to vector<8x8xi32>
      %59 = arith.sitofp %58 : vector<8x8xi32> to vector<8x8xf32>
      %60 = arith.truncf %59 : vector<8x8xf32> to vector<8x8xbf16>
      %c0_15 = arith.constant 0 : index
      %c0_16 = arith.constant 0 : index
      %61 = vector.load %arg10[%c0_15, %c0_16] : memref<8x128xf32, #tpu.memory_space<vmem>>, vector<8x128xf32>
      %c0_17 = arith.constant 0 : index
      %c0_18 = arith.constant 0 : index
      %c0_19 = arith.constant 0 : index
      %62 = vector.load %arg7[%c0_17, %c0_18, %c0_19] : memref<1x8x128xbf16, #tpu.memory_space<vmem>>, vector<1x8x128xbf16>
      %63 = vector.shape_cast %62 : vector<1x8x128xbf16> to vector<8x128xbf16>
      %cst_20 = arith.constant dense<0.000000e+00> : vector<8x128xf32>
      %64 = tpu.matmul %60, %63, %cst_20 {dimension_numbers = #tpu.dot_dimension_numbers<[1], [0], [0], [1], [0, 0, 1, 1], [], []>} : vector<8x8xbf16>, vector<8x128xbf16>, vector<8x128xf32> -> vector<8x128xf32>
      %65 = arith.addf %61, %64 : vector<8x128xf32>
      %c0_21 = arith.constant 0 : index
      %c0_22 = arith.constant 0 : index
      %66 = vector.load %arg10[%c0_21, %c0_22] : memref<8x128xf32, #tpu.memory_space<vmem>>, vector<8x128xf32>
      tpu.vector_store %arg10[%c0_21, %c0_22], %65 {strides = array<i32>} : memref<8x128xf32, #tpu.memory_space<vmem>>, vector<8x128xf32>,
    } else {
    }
    %c1_i32 = arith.constant 1 : i32
    %47 = arith.cmpi eq, %arg2, %c1_i32 : i32
    %48 = arith.andi %32, %47 : i1
    %49 = arith.extui %48 : i1 to i32
    %c0_i32_14 = arith.constant 0 : i32
    %50 = arith.cmpi ne, %49, %c0_i32_14 : i32
    scf.if %50 {
      %c0_15 = arith.constant 0 : index
      %c0_16 = arith.constant 0 : index
      %51 = vector.load %arg9[%c0_15, %c0_16] : memref<8x128xf32, #tpu.memory_space<vmem>>, vector<8x128xf32>
      %c0_17 = arith.constant 0 : index
      %c0_18 = arith.constant 0 : index
      %52 = vector.load %arg10[%c0_17, %c0_18] : memref<8x128xf32, #tpu.memory_space<vmem>>, vector<8x128xf32>
      %53 = arith.truncf %52 : vector<8x128xf32> to vector<8x128xbf16>
      %c0_19 = arith.constant 0 : index
      %c0_20 = arith.constant 0 : index
      %c0_21 = arith.constant 0 : index
      %54 = vector.load %arg8[%c0_19, %c0_20, %c0_21] : memref<1x128x128xbf16, #tpu.memory_space<vmem>>, vector<1x128x128xbf16>
      %55 = vector.shape_cast %54 : vector<1x128x128xbf16> to vector<128x128xbf16>
      %cst_22 = arith.constant dense<0.000000e+00> : vector<8x128xf32>
      %56 = tpu.matmul %53, %55, %cst_22 {dimension_numbers = #tpu.dot_dimension_numbers<[1], [0], [0], [1], [0, 0, 1, 1], [], []>} : vector<8x128xbf16>, vector<128x128xbf16>, vector<8x128xf32> -> vector<8x128xf32>
      %57 = arith.addf %51, %56 : vector<8x128xf32>
      %c0_23 = arith.constant 0 : index
      %c0_24 = arith.constant 0 : index
      %58 = vector.load %arg9[%c0_23, %c0_24] : memref<8x128xf32, #tpu.memory_space<vmem>>, vector<8x128xf32>
      tpu.vector_store %arg9[%c0_23, %c0_24], %57 {strides = array<i32>} : memref<8x128xf32, #tpu.memory_space<vmem>>, vector<8x128xf32>,
    } else {
    }
    return
  }
  func.func @transform_0(%arg0: i32, %arg1: i32, %arg2: i32, %arg3: memref<3xi32, #tpu.memory_space<smem>>, %arg4: memref<3xi32, #tpu.memory_space<smem>>, %arg5: memref<3xi32, #tpu.memory_space<smem>>) -> (i32, i32) {
    %c0_i32 = arith.constant 0 : i32
    %c0_i32_0 = arith.constant 0 : i32
    return %arg0, %c0_i32 : i32, i32
  }
  func.func @transform_1(%arg0: i32, %arg1: i32, %arg2: i32, %arg3: memref<3xi32, #tpu.memory_space<smem>>, %arg4: memref<3xi32, #tpu.memory_space<smem>>, %arg5: memref<3xi32, #tpu.memory_space<smem>>) -> (i32, i32, i32) {
    %0 = arith.index_cast %arg1 : i32 to index
    %1 = memref.load %arg5[%0] : memref<3xi32, #tpu.memory_space<smem>>
    %c1_i32 = arith.constant 1 : i32
    %2 = arith.subi %1, %c1_i32 : i32
    %3 = arith.minsi %arg2, %2 : i32
    %c0_i32 = arith.constant 0 : i32
    %c0_i32_0 = arith.constant 0 : i32
    return %arg1, %3, %c0_i32 : i32, i32, i32
  }
  func.func @transform_2(%arg0: i32, %arg1: i32, %arg2: i32, %arg3: memref<3xi32, #tpu.memory_space<smem>>, %arg4: memref<3xi32, #tpu.memory_space<smem>>, %arg5: memref<3xi32, #tpu.memory_space<smem>>) -> (i32, i32, i32) {
    %c0_i32 = arith.constant 0 : i32
    %c0_i32_0 = arith.constant 0 : i32
    %c0_i32_1 = arith.constant 0 : i32
    return %arg1, %c0_i32, %c0_i32_0 : i32, i32, i32
  }
  func.func @transform_3(%arg0: i32, %arg1: i32, %arg2: i32, %arg3: memref<3xi32, #tpu.memory_space<smem>>, %arg4: memref<3xi32, #tpu.memory_space<smem>>, %arg5: memref<3xi32, #tpu.memory_space<smem>>) -> (i32, i32) {
    %c0_i32 = arith.constant 0 : i32
    %c0_i32_0 = arith.constant 0 : i32
    return %arg0, %c0_i32 : i32, i32
  }
}

</mosaic_0001>

<llo_original>
// kernel: adaptive_input_embedding.1
$region0: #{adaptive_input_embedding.1}
  #allocation0 [shape = 'u32[]', space=smem, size = 0x4, offset = 0x4, fixed_abs, tag = 'smem constant byte address 0x4 - core index']
  #allocation1 [shape = 'u32[144,128]{1,0:T(1,128)}', space=vmem, size = 0x12000, scoped, tag = 'internal scratch']
  #allocation2 [shape = 'f32[8,128]{1,0:T(8,128)}', space=vmem, size = 0x1000, scoped, tag = 'scratch operand']
  #allocation3 [shape = 's32[1]{0}', space=sflag, size = 0x4, scoped, tag = 'scoped memory for adaptive_input_embedding.1']
  #allocation4 [shape = 'u8[512]{0}', space=smem, size = 0x200, scoped, tag = 'prefetched SMEM operand 0']
  #allocation5 [shape = 'u8[512]{0}', space=smem, size = 0x200, scoped, tag = 'prefetched SMEM operand 1']
  #allocation6 [shape = 'u8[512]{0}', space=smem, size = 0x200, scoped, tag = 'prefetched SMEM operand 2']
  %s0 = inlined_call_operand.vmem [shape: s32[3], index: 0, kind: input, shape index: {}]
  %s1 = inlined_call_operand.vmem [shape: s32[3], index: 1, kind: input, shape index: {}]
  %s2 = inlined_call_operand.vmem [shape: s32[3], index: 2, kind: input, shape index: {}]
  %s3 = inlined_call_operand.vmem [shape: s32[24,1], index: 3, kind: input, shape index: {}]
  %s4 = inlined_call_operand.vmem [shape: bf16[3,16,128], index: 4, kind: input, shape index: {}]
  %s5 = inlined_call_operand.hbm [shape: bf16[3,128,128], index: 5, kind: input, shape index: {}]
  %s6 = inlined_call_operand.vmem [shape: f32[24,128], index: 6, kind: output, shape index: {}]
  %s7 = sld [smem:[#allocation0]]
  $region65: #{adaptive_input_embedding.1} parent=0
    _
  %s9 = ssub.s32 1, %s7
  %s10 = scalar_select 0, %s9, %s7
  %s11 = sshll.u32 %s0, 4
  %s12 = int_to_ptr.vmem [resolvable:$true] %s11
  %14 = dma.vmem_to_smem %s12, 16, [#allocation4], [#allocation3]
  %s15 = sshll.u32 %s1, 4
  %s16 = int_to_ptr.vmem [resolvable:$true] %s15
  %18 = dma.vmem_to_smem %s16, 16, [#allocation5], [#allocation3]
  %s19 = sshll.u32 %s2, 4
  %s20 = int_to_ptr.vmem [resolvable:$true] %s19
  %22 = dma.vmem_to_smem %s20, 16, [#allocation6], [#allocation3]
  %23 = dma.done [#allocation3], 48
  %24 = sfence
  $region1: #{adaptive_input_embedding.1} parent=0
    #allocation7 [shape = 'u8[65536]{0}', space=vmem, size = 0x10000, scoped, tag = 'input window, operand 5']
    #allocation8 [shape = 's32[2]{0}', space=sflag, size = 0x8, scoped, tag = 'scoped memory for adaptive_input_embedding.1']
    %25 = vsyncpa [#allocation8], 0
    %s26 = scalar_lea.sflag [#allocation8], 1
    %27 = vsyncpa %s26, 0
    loop: start=0, step=1, limit=20
    $region2: #{adaptive_input_embedding.1} parent=1 // loop_pre_header
      _
    $region3: #{adaptive_input_embedding.1} parent=1 // loop_header
      %s29 = sphi 0, %s33
      %p30 = scmp.ge.s32.totalorder %s29, 20
      %s36 = sphi 0, %s55
      %s37 = sphi 0, %s51
      %s38 = sphi 0, %s47
      %s39 = sphi 0, %s36
      %s40 = sphi 0, %s37
      %s41 = sphi 0, %s38
      %s42 = sphi 0, %s39
      %s43 = sphi 0, %s40
      %s44 = sphi 0, %s41
      %s58 = sphi 0, %s60
      %s61 = sphi 0, %s58
      %s62 = sphi 0, %s61
      %s78 = sphi 0, %s62
      %s94 = sphi 0, %s96
      %s97 = sphi 0, %s94
      %s98 = sphi 0, %s97
      %s114 = sphi 0, %s98
      %s120 = sphi 0, %s122
      %s123 = sphi 0, %s120
      %s124 = sphi 0, %s123
      %s140 = sphi 0, %s124
      %s146 = sphi 0, %s148
      %s149 = sphi 0, %s146
      %s150 = sphi 0, %s149
      %s166 = sphi 0, %s150
    $region4: #{adaptive_input_embedding.1} parent=1 // loop_header_branch
      %32 = sbr.rel (%p30) target = $region8
    $region5: #{adaptive_input_embedding.1} parent=1 // loop_body
      %s34 = ssub.s32 %s29, 1
      %s35 = ssub.s32 %s29, 2
      %s45 = sadd.s32 1, %s38
      %p46 = scmp.ge.s32.totalorder %s45, 2
      %s47 = scalar_select %p46, 0, %s45
      %s48 = sadd.s32 1, %s37
      %s49 = scalar_select %p46, %s48, %s37
      %p50 = scmp.ge.s32.totalorder %s49, 3
      %s51 = scalar_select %p50, 0, %s49
      %s52 = sadd.s32 1, %s36
      %s53 = scalar_select %p50, %s52, %s36
      %p54 = scmp.ge.s32.totalorder %s53, 3
      %s55 = scalar_select %p54, 0, %s53
      %s56 = ssub.s32 %s36, %s55
      %p57 = scmp.eq.s32.totalorder %s56, 0
      %s59 = sadd.s32 %s58, 1
      %s60 = scalar_select %p57, %s58, %s59
      %p63 = pneg %p57
      %p64 = scmp.eq.s32.totalorder %s29, 17
      %p65 = por %p63, %p64
      %p66 = scmp.ne.s32.totalorder %s58, %s61
      %p67 = scmp.eq.s32.totalorder %s29, 0
      %p68 = por %p66, %p67
      %p69 = scmp.ne.s32.totalorder %s58, %s61
      %p70 = scmp.eq.s32.totalorder %s34, 17
      %p71 = por %p69, %p70
      %p72 = scmp.ne.s32.totalorder %s61, %s62
      %p73 = scmp.eq.s32.totalorder %s34, 0
      %p74 = por %p72, %p73
      %p75 = scmp.ne.s32.totalorder %s61, %s62
      %p76 = scmp.eq.s32.totalorder %s35, 17
      %p77 = por %p75, %p76
      %p79 = scmp.ne.s32.totalorder %s62, %s78
      %p80 = scmp.eq.s32.totalorder %s35, 0
      %p81 = por %p79, %p80
      %s82 = sld [smem:[#allocation6 + %s37]]
      %s83 = ssub.s32 %s82, 1
      %p84 = scmp.lt.s32.totalorder %s38, %s83
      %s85 = scalar_select %p84, %s38, %s83
      %s86 = sld [smem:[#allocation6 + %s51]]
      %s87 = ssub.s32 %s86, 1
      %p88 = scmp.lt.s32.totalorder %s47, %s87
      %s89 = scalar_select %p88, %s47, %s87
      %s90 = ssub.s32 %s37, %s51
      %s91 = ssub.s32 %s85, %s89
      %s92 = sor.u32 %s90, %s91
      %p93 = scmp.eq.s32.totalorder %s92, 0
      %s95 = sadd.s32 %s94, 1
      %s96 = scalar_select %p93, %s94, %s95
      %p99 = pneg %p93
      %p100 = scmp.eq.s32.totalorder %s29, 17
      %p101 = por %p99, %p100
      %p102 = scmp.ne.s32.totalorder %s94, %s97
      %p103 = scmp.eq.s32.totalorder %s29, 0
      %p104 = por %p102, %p103
      %p105 = scmp.ne.s32.totalorder %s94, %s97
      %p106 = scmp.eq.s32.totalorder %s34, 17
      %p107 = por %p105, %p106
      %p108 = scmp.ne.s32.totalorder %s97, %s98
      %p109 = scmp.eq.s32.totalorder %s34, 0
      %p110 = por %p108, %p109
      %p111 = scmp.ne.s32.totalorder %s97, %s98
      %p112 = scmp.eq.s32.totalorder %s35, 17
      %p113 = por %p111, %p112
      %p115 = scmp.ne.s32.totalorder %s98, %s114
      %p116 = scmp.eq.s32.totalorder %s35, 0
      %p117 = por %p115, %p116
      %s118 = ssub.s32 %s37, %s51
      %p119 = scmp.eq.s32.totalorder %s118, 0
      %s121 = sadd.s32 %s120, 1
      %s122 = scalar_select %p119, %s120, %s121
      %p125 = pneg %p119
      %p126 = scmp.eq.s32.totalorder %s29, 17
      %p127 = por %p125, %p126
      %p128 = scmp.ne.s32.totalorder %s120, %s123
      %p129 = scmp.eq.s32.totalorder %s29, 0
      %p130 = por %p128, %p129
      %p131 = scmp.ne.s32.totalorder %s120, %s123
      %p132 = scmp.eq.s32.totalorder %s34, 17
      %p133 = por %p131, %p132
      %p134 = scmp.ne.s32.totalorder %s123, %s124
      %p135 = scmp.eq.s32.totalorder %s34, 0
      %p136 = por %p134, %p135
      %p137 = scmp.ne.s32.totalorder %s123, %s124
      %p138 = scmp.eq.s32.totalorder %s35, 17
      %p139 = por %p137, %p138
      %p141 = scmp.ne.s32.totalorder %s124, %s140
      %p142 = scmp.eq.s32.totalorder %s35, 0
      %p143 = por %p141, %p142
      %s144 = ssub.s32 %s36, %s55
      %p145 = scmp.eq.s32.totalorder %s144, 0
      %s147 = sadd.s32 %s146, 1
      %s148 = scalar_select %p145, %s146, %s147
      %p151 = pneg %p145
      %p152 = scmp.eq.s32.totalorder %s29, 17
      %p153 = por %p151, %p152
      %p154 = scmp.ne.s32.totalorder %s146, %s149
      %p155 = scmp.eq.s32.totalorder %s29, 0
      %p156 = por %p154, %p155
      %p157 = scmp.ne.s32.totalorder %s146, %s149
      %p158 = scmp.eq.s32.totalorder %s34, 17
      %p159 = por %p157, %p158
      %p160 = scmp.ne.s32.totalorder %s149, %s150
      %p161 = scmp.eq.s32.totalorder %s34, 0
      %p162 = por %p160, %p161
      %p163 = scmp.ne.s32.totalorder %s149, %s150
      %p164 = scmp.eq.s32.totalorder %s35, 17
      %p165 = por %p163, %p164
      %p167 = scmp.ne.s32.totalorder %s150, %s166
      %p168 = scmp.eq.s32.totalorder %s35, 0
      %p169 = por %p167, %p168
      %p170 = scmp.le.s32.totalorder 1, %s29
      %p171 = scmp.lt.s32.totalorder %s29, 19
      %p172 = pnand %p170, %p171
      %p173 = pneg %p172
      // Predicated region
      $region9: #{adaptive_input_embedding.1} parent=5 // pred_check
        _
      $region10: #{adaptive_input_embedding.1} parent=5 // pred_check_branch
        %175 = sbr.rel (%p172) target = $region12
      $region11: #{adaptive_input_embedding.1} parent=5 // pred_region
        %s176 = ssub.s32 %s29, 1
      $region12: #{adaptive_input_embedding.1} parent=5 // pred_fallthru
        _
      %p177 = scmp.lt.s32.totalorder %s29, 18
      // Predicated region
      $region13: #{adaptive_input_embedding.1} parent=5 // pred_check
        %p178 = pneg %p177
      $region14: #{adaptive_input_embedding.1} parent=5 // pred_check_branch
        %180 = sbr.rel (%p178) target = $region16
      $region15: #{adaptive_input_embedding.1} parent=5 // pred_region
        // Predicated region
        $region17: #{adaptive_input_embedding.1} parent=15 // pred_check
          %p181 = pneg %p68
        $region18: #{adaptive_input_embedding.1} parent=15 // pred_check_branch
          %183 = sbr.rel (%p181) target = $region20
        $region19: #{adaptive_input_embedding.1} parent=15 // pred_region
          %p184 = scmp.lt.s32.totalorder %s36, 2
          %s185 = scalar_select %p184, %s36, 2
          %s186 = smul.addr %s185, 8
          %s187 = scalar_lea.vmem %s3, %s186
        $region20: #{adaptive_input_embedding.1} parent=15 // pred_fallthru
          _
        // Predicated region
        $region21: #{adaptive_input_embedding.1} parent=15 // pred_check
          %p188 = pneg %p104
        $region22: #{adaptive_input_embedding.1} parent=15 // pred_check_branch
          %190 = sbr.rel (%p188) target = $region24
        $region23: #{adaptive_input_embedding.1} parent=15 // pred_region
          %s191 = sld [smem:[#allocation6 + %s37]]
          %s192 = ssub.s32 %s191, 1
          %p193 = scmp.lt.s32.totalorder %s38, %s192
          %s194 = scalar_select %p193, %s38, %s192
          %p195 = scmp.lt.s32.totalorder %s37, 2
          %s196 = scalar_select %p195, %s37, 2
          %p197 = scmp.lt.s32.totalorder %s194, 1
          %s198 = scalar_select %p197, %s194, 1
          %s199 = smul.addr %s196, 2
          %s200 = sadd.s32 %s198, %s199
          %s201 = smul.addr %s200, 4
          %s202 = scalar_lea.vmem %s4, %s201
          %s203 = sld [smem:[#allocation6 + %s37]]
          %s204 = ssub.s32 %s203, 1
          %p205 = scmp.lt.s32.totalorder %s38, %s204
          %s206 = scalar_select %p205, %s38, %s204
        $region24: #{adaptive_input_embedding.1} parent=15 // pred_fallthru
          _
        // Predicated region
        $region25: #{adaptive_input_embedding.1} parent=15 // pred_check
          %p207 = pneg %p130
        $region26: #{adaptive_input_embedding.1} parent=15 // pred_check_branch
          %209 = sbr.rel (%p207) target = $region28
        $region27: #{adaptive_input_embedding.1} parent=15 // pred_region
          %s210 = sand.u32 %s120, 1
          %s211 = scalar_lea.sflag [#allocation8], %s210
          %s212 = sand.u32 %s120, 1
          %s213 = smul.addr %s212, 64
          %s214 = scalar_lea.vmem [#allocation7], %s213
          %s216 = ssub.s32 1024, 1024
          %217 = vsyncadd %s211, %s216
          %s218 = smul.addr %s37, 16
          %s219 = smul.addr %s218, 64
          %s220 = scalar_lea.hbm %s5, %s219
          %s221 = sshll.u32 %s214, 4
          %s222 = int_to_ptr.vmem [resolvable:$true] %s221
          %227 = dma.hbm_to_vmem [thread:$0]  %s220, 1024, %s222, %s211, 64, 64, 4
        $region28: #{adaptive_input_embedding.1} parent=15 // pred_fallthru
          _
      $region16: #{adaptive_input_embedding.1} parent=5 // pred_fallthru
        _
      %p228 = scmp.le.s32.totalorder 1, %s29
      %p229 = scmp.lt.s32.totalorder %s29, 19
      %p230 = pnand %p228, %p229
      %p231 = pneg %p230
      // Predicated region
      $region29: #{adaptive_input_embedding.1} parent=5 // pred_check
        _
      $region30: #{adaptive_input_embedding.1} parent=5 // pred_check_branch
        %233 = sbr.rel (%p230) target = $region32
      $region31: #{adaptive_input_embedding.1} parent=5 // pred_region
        %s234 = ssub.s32 %s29, 1
        %s235 = sand.u32 %s123, 1
        %s236 = scalar_lea.sflag [#allocation8], %s235
        %s237 = sand.u32 %s123, 1
        %s238 = smul.addr %s237, 64
        %s239 = scalar_lea.vmem [#allocation7], %s238
        // Predicated region
        $region33: #{adaptive_input_embedding.1} parent=31 // pred_check
          %p240 = pneg %p136
        $region34: #{adaptive_input_embedding.1} parent=31 // pred_check_branch
          %242 = sbr.rel (%p240) target = $region36
        $region35: #{adaptive_input_embedding.1} parent=31 // pred_region
          %243 = dma.done %s236, 1024
        $region36: #{adaptive_input_embedding.1} parent=31 // pred_fallthru
          _
        %p244 = scmp.lt.s32.totalorder %s39, 2
        %s245 = scalar_select %p244, %s39, 2
        %s246 = smul.addr %s245, 8
        %s247 = scalar_lea.vmem %s3, %s246
        %p248 = pneg %p74
        %p249 = pneg %p71
        %s250 = sld [smem:[#allocation6 + %s40]]
        %s251 = ssub.s32 %s250, 1
        %p252 = scmp.lt.s32.totalorder %s41, %s251
        %s253 = scalar_select %p252, %s41, %s251
        %p254 = scmp.lt.s32.totalorder %s40, 2
        %s255 = scalar_select %p254, %s40, 2
        %p256 = scmp.lt.s32.totalorder %s253, 1
        %s257 = scalar_select %p256, %s253, 1
        %s258 = smul.addr %s255, 2
        %s259 = sadd.s32 %s257, %s258
        %s260 = smul.addr %s259, 4
        %s261 = scalar_lea.vmem %s4, %s260
        %p262 = pneg %p110
        %p263 = pneg %p107
        %s264 = sand.u32 %s123, 1
        %s265 = scalar_lea.sflag [#allocation8], %s264
        %s266 = sand.u32 %s123, 1
        %s267 = smul.addr %s266, 64
        %s268 = scalar_lea.vmem [#allocation7], %s267
        %p269 = pneg %p136
        %p270 = pneg %p133
        %p271 = pneg %p162
        %p272 = pneg %p159
        %p273 = scmp.lt.s32.totalorder %s39, 2
        %s274 = scalar_select %p273, %s39, 2
        %s275 = smul.addr %s274, 8
        %s276 = scalar_lea.vmem %s6, %s275
        %p277 = scmp.lt.s32.totalorder %s39, 2
        %s278 = scalar_select %p277, %s39, 2
        %s279 = smul.addr %s278, 8
        %s280 = scalar_lea.vmem %s3, %s279
        %s281 = sld [smem:[#allocation6 + %s40]]
        %s282 = ssub.s32 %s281, 1
        %p283 = scmp.lt.s32.totalorder %s41, %s282
        %s284 = scalar_select %p283, %s41, %s282
        %p285 = scmp.lt.s32.totalorder %s40, 2
        %s286 = scalar_select %p285, %s40, 2
        %p287 = scmp.lt.s32.totalorder %s284, 1
        %s288 = scalar_select %p287, %s284, 1
        %s289 = smul.addr %s286, 2
        %s290 = sadd.s32 %s288, %s289
        %s291 = smul.addr %s290, 4
        %s292 = scalar_lea.vmem %s4, %s291
        %s293 = sld [smem:[#allocation6 + %s40]]
        %s294 = ssub.s32 %s293, 1
        %p295 = scmp.lt.s32.totalorder %s41, %s294
        %s296 = scalar_select %p295, %s41, %s294
        %p297 = scmp.lt.s32.totalorder %s39, 2
        %s298 = scalar_select %p297, %s39, 2
        %s299 = smul.addr %s298, 8
        %s300 = scalar_lea.vmem %s6, %s299
        %p302 = scmp.eq.s32.totalorder %s40, 0
        %p303 = scmp.eq.s32.totalorder %s41, 0
        %p304 = pnand %p302, %p303
        %p305 = pneg %p304
        // Predicated region
        $region37: #{adaptive_input_embedding.1} parent=31 // pred_check
          _
        $region38: #{adaptive_input_embedding.1} parent=31 // pred_check_branch
          %307 = sbr.rel (%p304) target = $region40
        $region39: #{adaptive_input_embedding.1} parent=31 // pred_region
          %308 = vst [vmem:[%s300] sm:$0xff] 0.0
        $region40: #{adaptive_input_embedding.1} parent=31 // pred_fallthru
          _
        %s309 = sld [smem:[#allocation4 + %s40]]
        %s310 = sld [smem:[#allocation5 + %s40]]
        %v311 = vld [vmem:[%s280] sm:$0xff]
        %v312 = vstv %s309
        %vm313 = vcmp.ge.s32.totalorder %v311, %v312
        %v314 = vstv %s310
        %vm315 = vcmp.le.s32.totalorder %v311, %v314
        %vm316 = vmand %vm313, %vm315
        %v317 = vsub.s32 %v311, %v312
        %s318 = smul.u32 %s41, 8
        %v319 = vstv %s318
        %vm320 = vcmp.ge.s32.totalorder %v317, %v319
        %vm321 = vmand %vm316, %vm320
        %s322 = sadd.s32 %s318, 8
        %v323 = vstv %s322
        %vm324 = vcmp.lt.s32.totalorder %v317, %v323
        %vm325 = vmand %vm321, %vm324
        %v326 = vsel %vm316, 1.0, 0.0
        %vm327 = vcmask 7168
        %v328 = vsel %vm327, %v326, -inf
        %329 = vmax.xlane.f32.xlu0 %v328
        %v330 = vpop.xlane.xlu0 %329
        %v331 = vrot.slane %v330, 4
        %v332 = vmax.f32 %v330, %v331
        %v333 = vrot.slane %v332, 2
        %v334 = vmax.f32 %v332, %v333
        %v335 = vrot.slane %v334, 1
        %v336 = vmax.f32 %v334, %v335
        %s337 = vtos %v336
        %p338 = scmp.gt.f32.partialorder %s337, 0.0
        %v339 = vsel %vm325, 1.0, 0.0
        %v340 = vsel %vm327, %v339, -inf
        %341 = vmax.xlane.f32.xlu0 %v340
        %v342 = vpop.xlane.xlu0 %341
        %v343 = vrot.slane %v342, 4
        %v344 = vmax.f32 %v342, %v343
        %v345 = vrot.slane %v344, 2
        %v346 = vmax.f32 %v344, %v345
        %v347 = vrot.slane %v346, 1
        %v348 = vmax.f32 %v346, %v347
        %s349 = vtos %v348
        %p350 = scmp.gt.f32.partialorder %s349, 0.0
        %p351 = pnand %p338, %p303
        %p352 = pneg %p351
        // Predicated region
        $region41: #{adaptive_input_embedding.1} parent=31 // pred_check
          _
        $region42: #{adaptive_input_embedding.1} parent=31 // pred_check_branch
          %354 = sbr.rel (%p351) target = $region44
        $region43: #{adaptive_input_embedding.1} parent=31 // pred_region
          %355 = vst [vmem:[#allocation2] sm:$0xff] 0.0
        $region44: #{adaptive_input_embedding.1} parent=31 // pred_fallthru
          _
        // Predicated region
        $region45: #{adaptive_input_embedding.1} parent=31 // pred_check
          %p356 = pneg %p350
        $region46: #{adaptive_input_embedding.1} parent=31 // pred_check_branch
          %358 = sbr.rel (%p356) target = $region48
        $region47: #{adaptive_input_embedding.1} parent=31 // pred_region
          %v359 = vlaneseq
          %v360 = vand.u32 %v359, 127
          %v361 = vadd.s32 %v360, %v319
          %362 = vset.pattern.permute.xlu0 0
          %363 = vperm.xlu0 %362, %v317
          %v364 = vpop.permute.xlu0 %363
          %vm365 = vcmp.eq.s32.totalorder %v361, %v364
          %v366 = vsel %vm316, 1, 0
          %367 = vset.pattern.permute.xlu0 0
          %368 = vperm.xlu0 %367, %v366
          %v369 = vpop.permute.xlu0 %368
          %vm370 = vcmp.eq.s32.totalorder %v369, 1
          %vm371 = vmand %vm365, %vm370
          %v372 = vsel %vm371, 1, 0
          %v373 = vcvt.s32.f32 %v372
          %v374 = vpack.c.bf16 %v373, %v373
          %v375 = vld [vmem:[#allocation2] sm:$0xff]
          %v376 = vld [vmem:[%s292] sm:$0xf]
          %vm377 = vcmask 64512
          %v379 = vsel %vm377, %v374, 0
          %vm381 = vcmask 1043456
          %v383 = vsel %vm381, %v376, 0
          %385 = vmatprep.subr.bf16.mxu0 0
          %386 = vmatpush1.bf16.msra.mxu0 0
          %387 = vmatprep.subr.bf16.mxu0 0
          %388 = vmatpush1.bf16.msra.mxu0 0
          %389 = vmatprep.subr.bf16.mxu0 0
          %390 = vmatpush1.bf16.msra.mxu0 0
          %391 = vmatprep.subr.bf16.mxu0 0
          %392 = vmatpush1.bf16.msra.mxu0 0
          %393 = vmatprep.subr.bf16.mxu0 0
          %394 = vmatpush1.bf16.msra.mxu0 0
          %395 = vmatprep.subr.bf16.mxu0 0
          %396 = vmatpush1.bf16.msra.mxu0 0
          %397 = vmatprep.subr.bf16.mxu0 0
          %398 = vmatpush1.bf16.msra.mxu0 0
          %399 = vmatprep.subr.bf16.mxu0 0
          %400 = vmatpush1.bf16.msra.mxu0 %v383
          %401 = vmatprep.subr.bf16.mxu0 0
          %402 = vmatpush2.bf16.msra.mxu0 0
          %403 = vmatprep.subr.bf16.mxu0 0
          %404 = vmatpush2.bf16.msra.mxu0 0
          %405 = vmatprep.subr.bf16.mxu0 0
          %406 = vmatpush2.bf16.msra.mxu0 0
          %407 = vmatprep.subr.bf16.mxu0 0
          %408 = vmatpush2.bf16.msra.mxu0 0
          %409 = vmatprep.subr.bf16.mxu0 0
          %410 = vmatpush2.bf16.msra.mxu0 0
          %411 = vmatprep.subr.bf16.mxu0 0
          %412 = vmatpush2.bf16.msra.mxu0 0
          %413 = vmatprep.subr.bf16.mxu0 0
          %414 = vmatpush2.bf16.msra.mxu0 0
          %415 = vmatprep.subr.bf16.mxu0 0
          %416 = vmatpush2.bf16.msra.mxu0 0
          %417 = vmatprep.mubr.bf16.mxu0 0
          %418 = vmatmul.mubr.bf16.gmra.mxu0 %v379
          %v419 = vpop.f32.mrf.mxu0
          %v420 = vadd.f32 0.0, %v419
          %v421 = vpop.f32.mrf.mxu0
          %v422 = vpop.f32.mrf.mxu0
          %v423 = vpop.f32.mrf.mxu0
          %424 = vdwg.mxu0
          %v425 = vadd.f32 %v375, %v420
          %426 = vst [vmem:[#allocation2] sm:$0xff] %v425
        $region48: #{adaptive_input_embedding.1} parent=31 // pred_fallthru
          _
        %p427 = scmp.eq.s32.totalorder %s41, 1
        %p428 = pnand %p338, %p427
        %p429 = pneg %p428
        // Predicated region
        $region49: #{adaptive_input_embedding.1} parent=31 // pred_check
          _
        $region50: #{adaptive_input_embedding.1} parent=31 // pred_check_branch
          %431 = sbr.rel (%p428) target = $region52
        $region51: #{adaptive_input_embedding.1} parent=31 // pred_region
          %v432 = vld [vmem:[%s300] sm:$0xff]
          %v433 = vld [vmem:[#allocation2] sm:$0xff]
          %v434 = vpack.c.bf16 %v433, %v433
          %v435 = vld [vmem:[%s239] sm:$0xf]
          %v436 = vld [vmem:[%s239 + $0x4] sm:$0xf]
          %v437 = vld [vmem:[%s239 + $0x8] sm:$0xf]
          %v438 = vld [vmem:[%s239 + $0xc] sm:$0xf]
          %v439 = vld [vmem:[%s239 + $0x10] sm:$0xf]
          %v440 = vld [vmem:[%s239 + $0x14] sm:$0xf]
          %v441 = vld [vmem:[%s239 + $0x18] sm:$0xf]
          %v442 = vld [vmem:[%s239 + $0x1c] sm:$0xf]
          %v443 = vld [vmem:[%s239 + $0x20] sm:$0xf]
          %v444 = vld [vmem:[%s239 + $0x24] sm:$0xf]
          %v445 = vld [vmem:[%s239 + $0x28] sm:$0xf]
          %v446 = vld [vmem:[%s239 + $0x2c] sm:$0xf]
          %v447 = vld [vmem:[%s239 + $0x30] sm:$0xf]
          %v448 = vld [vmem:[%s239 + $0x34] sm:$0xf]
          %v449 = vld [vmem:[%s239 + $0x38] sm:$0xf]
          %v450 = vld [vmem:[%s239 + $0x3c] sm:$0xf]
          %v467 = vunpack.c.l.b16 %v435
          %v468 = vunpack.c.l.b16 %v436
          %v469 = vunpack.c.l.b16 %v437
          %v470 = vunpack.c.l.b16 %v438
          %v471 = vunpack.c.l.b16 %v439
          %v472 = vunpack.c.l.b16 %v440
          %v473 = vunpack.c.l.b16 %v441
          %v474 = vunpack.c.l.b16 %v442
          %v475 = vunpack.c.l.b16 %v443
          %v476 = vunpack.c.l.b16 %v444
          %v477 = vunpack.c.l.b16 %v445
          %v478 = vunpack.c.l.b16 %v446
          %v479 = vunpack.c.l.b16 %v447
          %v480 = vunpack.c.l.b16 %v448
          %v481 = vunpack.c.l.b16 %v449
          %v482 = vunpack.c.l.b16 %v450
          %v483 = vpack.c.b16 %v468, %v467
          %v484 = vpack.c.b16 %v470, %v469
          %v485 = vpack.c.b16 %v472, %v471
          %v486 = vpack.c.b16 %v474, %v473
          %v487 = vpack.c.b16 %v476, %v475
          %v488 = vpack.c.b16 %v478, %v477
          %v489 = vpack.c.b16 %v480, %v479
          %v490 = vpack.c.b16 %v482, %v481
          %499 = vmatprep.subr.bf16.mxu0 0
          %500 = vmatpush1.bf16.msra.mxu0 %v490
          %501 = vmatprep.subr.bf16.mxu0 0
          %502 = vmatpush1.bf16.msra.mxu0 %v489
          %503 = vmatprep.subr.bf16.mxu0 0
          %504 = vmatpush1.bf16.msra.mxu0 %v488
          %505 = vmatprep.subr.bf16.mxu0 0
          %506 = vmatpush1.bf16.msra.mxu0 %v487
          %507 = vmatprep.subr.bf16.mxu0 0
          %508 = vmatpush1.bf16.msra.mxu0 %v486
          %509 = vmatprep.subr.bf16.mxu0 0
          %510 = vmatpush1.bf16.msra.mxu0 %v485
          %511 = vmatprep.subr.bf16.mxu0 0
          %512 = vmatpush1.bf16.msra.mxu0 %v484
          %513 = vmatprep.subr.bf16.mxu0 0
          %514 = vmatpush1.bf16.msra.mxu0 %v483
          %515 = vmatprep.subr.bf16.mxu0 0
          %516 = vmatpush2.bf16.msra.mxu0 0
          %517 = vmatprep.subr.bf16.mxu0 0
          %518 = vmatpush2.bf16.msra.mxu0 0
          %519 = vmatprep.subr.bf16.mxu0 0
          %520 = vmatpush2.bf16.msra.mxu0 0
          %521 = vmatprep.subr.bf16.mxu0 0
          %522 = vmatpush2.bf16.msra.mxu0 0
          %523 = vmatprep.subr.bf16.mxu0 0
          %524 = vmatpush2.bf16.msra.mxu0 0
          %525 = vmatprep.subr.bf16.mxu0 0
          %526 = vmatpush2.bf16.msra.mxu0 0
          %527 = vmatprep.subr.bf16.mxu0 0
          %528 = vmatpush2.bf16.msra.mxu0 0
          %529 = vmatprep.subr.bf16.mxu0 0
          %530 = vmatpush2.bf16.msra.mxu0 0
          %531 = vmatprep.mubr.bf16.mxu0 0
          %532 = vmatmul.mubr.bf16.gmra.mxu0 %v434
          %v533 = vpop.f32.mrf.mxu0
          %v534 = vadd.f32 0.0, %v533
          %v535 = vpop.f32.mrf.mxu0
          %v536 = vpop.f32.mrf.mxu0
          %v537 = vpop.f32.mrf.mxu0
          %538 = vdwg.mxu0
          %v539 = vadd.f32 %v432, %v534
          %540 = vst [vmem:[%s300] sm:$0xff] %v539
        $region52: #{adaptive_input_embedding.1} parent=31 // pred_fallthru
          _
        %p541 = scmp.lt.s32.totalorder %s39, 2
        %s542 = scalar_select %p541, %s39, 2
        %s543 = smul.addr %s542, 8
        %s544 = scalar_lea.vmem %s6, %s543
        // Predicated region
        $region53: #{adaptive_input_embedding.1} parent=31 // pred_check
          %p545 = pneg %p159
        $region54: #{adaptive_input_embedding.1} parent=31 // pred_check_branch
          %547 = sbr.rel (%p545) target = $region56
        $region55: #{adaptive_input_embedding.1} parent=31 // pred_region
          _
        $region56: #{adaptive_input_embedding.1} parent=31 // pred_fallthru
          _
      $region32: #{adaptive_input_embedding.1} parent=5 // pred_fallthru
        _
      %p548 = scmp.le.s32.totalorder 2, %s29
      // Predicated region
      $region57: #{adaptive_input_embedding.1} parent=5 // pred_check
        %p549 = pneg %p548
      $region58: #{adaptive_input_embedding.1} parent=5 // pred_check_branch
        %551 = sbr.rel (%p549) target = $region60
      $region59: #{adaptive_input_embedding.1} parent=5 // pred_region
        %s552 = ssub.s32 %s29, 2
        // Predicated region
        $region61: #{adaptive_input_embedding.1} parent=59 // pred_check
          %p553 = pneg %p165
        $region62: #{adaptive_input_embedding.1} parent=59 // pred_check_branch
          %555 = sbr.rel (%p553) target = $region64
        $region63: #{adaptive_input_embedding.1} parent=59 // pred_region
          %p556 = scmp.lt.s32.totalorder %s42, 2
          %s557 = scalar_select %p556, %s42, 2
          %s558 = smul.addr %s557, 8
          %s559 = scalar_lea.vmem %s6, %s558
        $region64: #{adaptive_input_embedding.1} parent=59 // pred_fallthru
          _
      $region60: #{adaptive_input_embedding.1} parent=5 // pred_fallthru
        _
    $region6: #{adaptive_input_embedding.1} parent=1 // loop_footer
      %s33 = sadd.s32 1, %s29
    $region7: #{adaptive_input_embedding.1} parent=1 // loop_footer_branch
      %28 = sbr.rel target = $region3
    $region8: #{adaptive_input_embedding.1} parent=1 // loop_exit
      _
    %560 = vsyncpa [#allocation8], 1
    %s561 = scalar_lea.sflag [#allocation8], 1
    %562 = vsyncpa %s561, 1

</llo_original>
